<compile_context>
chip_gen: v5e
topology: v5e:2x2
jax: 0.10.0
libtpu: 0.0.40
codegen_flags: <defaults>
</compile_context>

<pallas_src>
import functools

import jax
import jax.numpy as jnp
from jax.experimental import pallas as pl
from jax.experimental.pallas import tpu as pltpu


def _channel_attention_kernel(x_ref, w1_ref, w2_ref, o_ref,
                              sum_acc, max_acc,
                              *, hw_total, tile_hw, lane_w, needs_mask, inv_hw):
    # x_ref   : (B_TILE, C, TILE_HW)  wire dtype
    # w1_ref  : (Cr, C)  f32          (Conv2d(C, Cr, 1, bias=False) weight, squeezed)
    # w2_ref  : (C, Cr)  f32          (Conv2d(Cr, C, 1, bias=False) weight, squeezed)
    # o_ref   : (B_TILE, 1, C)        wire dtype
    # sum_acc : (B_TILE, C, LANE_W)   f32 scratch       (lane-folded running sum)
    # max_acc : (B_TILE, C, LANE_W)   f32/bf16 scratch  (lane-folded running max)
    hw = pl.program_id(1)
    n_hw = pl.num_programs(1)
    n_slices = tile_hw // lane_w
    bt, c = sum_acc.shape[0], sum_acc.shape[1]
    wire_max = max_acc.dtype == x_ref.dtype

    @pl.when(hw == 0)
    def _init():
        sum_acc[...] = jnp.zeros_like(sum_acc)
        max_acc[...] = jnp.full_like(max_acc, -jnp.inf)

    def _accumulate(masked):
        if masked:
            lane = jax.lax.broadcasted_iota(jnp.int32, (bt, c, lane_w), 2)

        def _step(j):
            lo = j * lane_w
            if not isinstance(lo, int):
                lo = pl.multiple_of(lo, lane_w)
            xj = x_ref[:, :, pl.ds(lo, lane_w)]          # lane-aligned slice, no relayout
            sj = xj.astype(jnp.float32)                  # accumulate sum in f32
            mj = xj if wire_max else sj                  # max is exact in wire dtype
            if masked:
                valid = (hw * tile_hw + j * lane_w + lane) < hw_total
                sj = jnp.where(valid, sj, 0.0)
                mj = jnp.where(valid, mj, jnp.array(-jnp.inf, mj.dtype))
            sum_acc[...] = sum_acc[...] + sj
            max_acc[...] = jnp.maximum(max_acc[...], mj)

        if n_slices <= 8:
            for j in range(n_slices):                    # short: fully unrolled
                _step(j)
        else:
            pl.loop(0, n_slices)(_step)                  # long: scf.for, no code bloat

    if needs_mask:
        # Only the last HW grid step needs the mask -> bulk tiles stay at
        # ~2-3 VPU ops/element (important on v7x where VALU can co-bind with HBM).
        @pl.when(hw < n_hw - 1)
        def _bulk():
            _accumulate(masked=False)

        @pl.when(hw == n_hw - 1)
        def _tail():
            _accumulate(masked=True)
    else:
        _accumulate(masked=False)

    @pl.when(hw == n_hw - 1)
    def _finalize():
        # Lane reductions happen exactly once per B tile, on lane-width scratch.
        avg = jnp.sum(sum_acc[...], axis=-1) * inv_hw                 # (bt, C) f32
        mx = jnp.max(max_acc[...], axis=-1).astype(jnp.float32)       # (bt, C) f32

        # Shared MLP: stack both pooled branches so the two tiny matmuls run once.
        p = jnp.concatenate([avg, mx], axis=0)                        # (2*bt, C)
        h = jax.lax.dot_general(p, w1_ref[...], (((1,), (1,)), ((), ())),
                                preferred_element_type=jnp.float32)   # (2*bt, Cr)
        h = jnp.maximum(h, 0.0)                                       # ReLU
        y = jax.lax.dot_general(h, w2_ref[...], (((1,), (1,)), ((), ())),
                                preferred_element_type=jnp.float32)   # (2*bt, C)

        out = y[:bt, :] + y[bt:, :]                                   # avg_out + max_out
        o_ref[...] = jax.nn.sigmoid(out)[:, None, :].astype(o_ref.dtype)


def _tpu_vmem_capacity_bytes():
    """Per-generation VMEM capacity (v5e/v6e: 128 MiB, v7x: 64 MiB); safe fallback."""
    try:
        info = pltpu.get_tpu_info()
    except Exception:
        return 64 << 20
    for attr in ("vmem_capacity_bytes", "vmem_bytes"):
        cap = getattr(info, attr, None)
        if cap:
            return int(cap)
    return 64 << 20


def _vpu_has_native_bf16():
    """True on v6e/v7x (bf16 VALU); False on v5e or when detection fails (safe f32 path)."""
    try:
        info = pltpu.get_tpu_info()
    except Exception:
        return False
    for attr in ("chip_version", "version", "chip", "name"):
        v = getattr(info, attr, None)
        if v is not None:
            s = str(v).lower()
            return not ("v5e" in s or "v5lite" in s or "v5_lite" in s or "v5 lite" in s)
    return False


def channel_attention(x, w1, w2, *, b_tile=None, tile_hw=None, x_buffers=2,
                      max_in_wire_dtype=None):
    """x: (B, C, H, W); w1: (C//16, C); w2: (C, C//16).

    Returns sigmoid(fc(avg_pool(x)) + fc(max_pool(x))) with shape (B, C, 1, 1),
    matching PyTorch ChannelAttention.forward. Output dtype follows x.dtype.
    """
    B, C, H, W = x.shape
    HW = H * W
    Cr, C_in = w1.shape
    assert C_in == C and w2.shape == (C, Cr)

    itemsize = jnp.dtype(x.dtype).itemsize
    vmem_cap = _tpu_vmem_capacity_bytes()

    # Running-max dtype: wire dtype (bf16) only on chips with native bf16 VPU.
    if max_in_wire_dtype is None:
        max_in_wire_dtype = (x.dtype == jnp.bfloat16) and _vpu_has_native_bf16()
    max_dtype = x.dtype if max_in_wire_dtype else jnp.float32
    max_itemsize = jnp.dtype(max_dtype).itemsize

    # ---- b_tile first: megacore split + DMA-run-length heuristics. --------------
    if b_tile is None:
        b_tile = min(B, 8)
        if B >= 2:
            # v7x megacore: need >= 2 B grid steps so the "parallel" axis splits TCs.
            b_tile = min(b_tile, -(-B // 2))
        # Large C: trade b_tile for tile_hw so the contiguous DMA run stays >= ~1K lanes.
        while b_tile > 1 and b_tile * C * 1024 * itemsize > (6 << 20):
            b_tile //= 2
    b_tile = max(1, min(b_tile, B))

    # ---- tile_hw: biggest lane-dense tile fitting an explicit VMEM budget. ------
    if tile_hw is None:
        if HW <= 128:
            tile_hw = HW                              # full-dim block (lane constraint)
        else:
            fixed = (b_tile * C * 128 * (4 + max_itemsize)   # lane-width accumulators
                     + 2 * 2 * C * Cr * 4                    # double-buffered weights
                     + 2 * b_tile * C * itemsize             # output buffers
                     + (1 << 20))                            # slack
            usable = min(vmem_cap // 2, 28 << 20)            # scoped budget incl. headroom
            per_buf = max((usable - fixed) // max(1, x_buffers), 256 * 1024)
            per_buf = min(per_buf, 8 << 20)                  # amortizes ~0.35us/step
            row_elems = per_buf // (b_tile * C * itemsize)
            tile_hw = max(128, (min(row_elems, HW) // 128) * 128)
    if tile_hw % 128 != 0 and tile_hw != HW:
        raise ValueError("tile_hw must be a multiple of 128 or equal to H*W")

    lane_w = min(tile_hw, 128)
    grid = (pl.cdiv(B, b_tile), pl.cdiv(HW, tile_hw))
    needs_mask = (HW % tile_hw) != 0

    # ---- explicit VMEM limit: x buffers + accumulators + weights + out + headroom.
    x_buf_bytes = b_tile * C * tile_hw * itemsize
    acc_bytes = b_tile * C * lane_w * (4 + max_itemsize)
    misc_bytes = 2 * 2 * C * Cr * 4 + 2 * b_tile * C * itemsize
    total_bytes = x_buffers * x_buf_bytes + acc_bytes + misc_bytes
    vmem_limit = int(total_bytes * 1.3) + (4 << 20)
    vmem_limit = max(vmem_limit, 32 << 20)
    vmem_limit = min(vmem_limit, max(vmem_cap - (4 << 20), 16 << 20))

    kernel = functools.partial(
        _channel_attention_kernel,
        hw_total=HW, tile_hw=tile_hw, lane_w=lane_w,
        needs_mask=needs_mask, inv_hw=1.0 / HW)

    # Keep the input dtype on the wire: free reshape, no wrapper-side astype copy.
    x3 = x.reshape(B, C, HW)

    x_spec_kwargs = {}
    if x_buffers != 2:
        x_spec_kwargs["pipeline_mode"] = pl.Buffered(x_buffers)

    cost = pl.CostEstimate(
        flops=2 * B * C * HW + 8 * B * C * Cr,
        transcendentals=B * C,
        bytes_accessed=B * C * HW * itemsize + 2 * C * Cr * 4 + B * C * itemsize)

    out = pl.pallas_call(
        kernel,
        out_shape=jax.ShapeDtypeStruct((B, 1, C), x.dtype),
        grid_spec=pltpu.PrefetchScalarGridSpec(
            num_scalar_prefetch=0,
            grid=grid,
            in_specs=[
                # x streamed over (B tile, HW tile); auto double/triple-buffered DMA.
                pl.BlockSpec((b_tile, C, tile_hw), lambda b, hw: (b, 0, hw),
                             **x_spec_kwargs),
                # weights: constant block index -> resident in VMEM for the whole grid.
                pl.BlockSpec((Cr, C), lambda b, hw: (0, 0)),
                pl.BlockSpec((C, Cr), lambda b, hw: (0, 0)),
            ],
            out_specs=pl.BlockSpec((b_tile, 1, C), lambda b, hw: (b, 0, 0)),
            scratch_shapes=[
                pltpu.VMEM((b_tile, C, lane_w), jnp.float32),   # lane-folded running sum
                pltpu.VMEM((b_tile, C, lane_w), max_dtype),     # lane-folded running max
            ],
        ),
        compiler_params=pltpu.CompilerParams(
            dimension_semantics=("parallel", "arbitrary"),
            vmem_limit_bytes=int(vmem_limit)),
        cost_estimate=cost,
    )(x3, w1.astype(jnp.float32), w2.astype(jnp.float32))

    return out.reshape(B, C, 1, 1)


def make_params(key, in_planes, ratio=16):
    """Deterministic weight init matching Conv2d(.., 1, bias=False) shapes with
    the 1x1 spatial dims squeezed away."""
    hidden = in_planes // ratio
    k1, k2 = jax.random.split(key)
    b1 = 1.0 / (in_planes ** 0.5)
    b2 = 1.0 / (hidden ** 0.5)
    w1 = jax.random.uniform(k1, (hidden, in_planes), jnp.float32, -b1, b1)
    w2 = jax.random.uniform(k2, (in_planes, hidden), jnp.float32, -b2, b2)
    return w1, w2


def _reference(x, w1, w2):
    """Pure-JAX reference of the same forward pass."""
    xf = x.astype(jnp.float32)
    avg = jnp.mean(xf, axis=(2, 3))
    mx = jnp.max(xf, axis=(2, 3))
    fc = lambda p: jnp.maximum(p @ w1.T, 0.0) @ w2.T
    out = jax.nn.sigmoid(fc(avg) + fc(mx))
    return out.reshape(x.shape[0], x.shape[1], 1, 1).astype(x.dtype)


if __name__ == "__main__":
    key = jax.random.PRNGKey(0)
    kx1, kx2, kx3, kp = jax.random.split(key, 4)

    # The module hard-codes in_planes // 16 inside fc, so C must be >= 16.
    B, C, H, W = 2, 32, 16, 16
    x = jax.random.normal(kx1, (B, C, H, W), jnp.float32)
    w1, w2 = make_params(kp, C)
    ref = _reference(x, w1, w2)

    # 1) Default heuristics: single HW step, two B grid steps (megacore-friendly).
    out = jax.block_until_ready(channel_attention(x, w1, w2))
    assert out.shape == (B, C, 1, 1)
    assert jnp.allclose(out, ref, atol=1e-5, rtol=1e-5)

    # 2) Forced tile_hw=128: exercises the running sum/max accumulation over HW steps.
    out = jax.block_until_ready(channel_attention(x, w1, w2, tile_hw=128))
    assert jnp.allclose(out, ref, atol=1e-5, rtol=1e-5)

    # 3) Odd spatial size + ragged batch tile: exercises the masked HW tail and the
    #    clipped partial B block (per-row MLP, so garbage OOB rows never mix in).
    B2, H2, W2 = 3, 10, 13
    x2 = jax.random.normal(kx2, (B2, C, H2, W2), jnp.float32)
    out2 = jax.block_until_ready(channel_attention(x2, w1, w2, tile_hw=128))
    assert jnp.allclose(out2, _reference(x2, w1, w2), atol=1e-5, rtol=1e-5)

    # 4) Larger spatial map: exercises the pl.loop (non-unrolled) slice-reduce path.
    x3 = jax.random.normal(kx3, (B, C, 64, 64), jnp.float32)
    out3 = jax.block_until_ready(channel_attention(x3, w1, w2))
    assert jnp.allclose(out3, _reference(x3, w1, w2), atol=1e-5, rtol=1e-5)

    print("KERNEL_OK")
</pallas_src>

<mosaic_0001>
module attributes {stable_mosaic.version = 11 : i64} {
  func.func @_channel_attention_kernel(%arg0: i32, %arg1: i32, %arg2: memref<1x32x256xf32, #tpu.memory_space<vmem>>, %arg3: memref<2x32xf32, #tpu.memory_space<vmem>>, %arg4: memref<32x2xf32, #tpu.memory_space<vmem>>, %arg5: memref<1x1x32xf32, #tpu.memory_space<vmem>>, %arg6: memref<1x32x128xf32, #tpu.memory_space<vmem>>, %arg7: memref<1x32x128xf32, #tpu.memory_space<vmem>>) attributes {dimension_semantics = [#tpu.dimension_semantics<parallel>, #tpu.dimension_semantics<arbitrary>], iteration_bounds = array<i64: 2, 1>, scalar_prefetch = 0 : i64, scratch_operands = 2 : i64, tpu.core_type = #tpu.core_type<tc>, window_params = [{transform_indices = @transform_0, window_bounds = array<i64: 1, 32, 256>}, {pipeline_mode = #tpu.pipeline_mode<synchronous>, transform_indices = @transform_1, window_bounds = array<i64: 2, 32>}, {pipeline_mode = #tpu.pipeline_mode<synchronous>, transform_indices = @transform_2, window_bounds = array<i64: 32, 2>}, {transform_indices = @transform_3, window_bounds = array<i64: 1, 1, 32>}]} {
    %c0_i32 = arith.constant 0 : i32
    %0 = arith.cmpi eq, %arg1, %c0_i32 : i32
    %1 = arith.extui %0 : i1 to i32
    %c0_i32_0 = arith.constant 0 : i32
    %2 = arith.cmpi ne, %1, %c0_i32_0 : i32
    scf.if %2 {
      %cst = arith.constant 0.000000e+00 : f32
      %20 = vector.broadcast %cst : f32 to vector<1x32x128xf32>
      %c0_31 = arith.constant 0 : index
      %c0_32 = arith.constant 0 : index
      %c0_33 = arith.constant 0 : index
      %21 = vector.load %arg6[%c0_31, %c0_32, %c0_33] : memref<1x32x128xf32, #tpu.memory_space<vmem>>, vector<1x32x128xf32>
      tpu.vector_store %arg6[%c0_31, %c0_32, %c0_33], %20 {strides = array<i32>} : memref<1x32x128xf32, #tpu.memory_space<vmem>>, vector<1x32x128xf32>,
      %cst_34 = arith.constant 0xFF800000 : f32
      %22 = vector.broadcast %cst_34 : f32 to vector<1x32x128xf32>
      %c0_35 = arith.constant 0 : index
      %c0_36 = arith.constant 0 : index
      %c0_37 = arith.constant 0 : index
      %23 = vector.load %arg7[%c0_35, %c0_36, %c0_37] : memref<1x32x128xf32, #tpu.memory_space<vmem>>, vector<1x32x128xf32>
      tpu.vector_store %arg7[%c0_35, %c0_36, %c0_37], %22 {strides = array<i32>} : memref<1x32x128xf32, #tpu.memory_space<vmem>>, vector<1x32x128xf32>,
    } else {
    }
    %c0 = arith.constant 0 : index
    %c0_1 = arith.constant 0 : index
    %c0_2 = arith.constant 0 : index
    %3 = vector.load %arg2[%c0, %c0_1, %c0_2] : memref<1x32x256xf32, #tpu.memory_space<vmem>>, vector<1x32x128xf32>
    %c0_3 = arith.constant 0 : index
    %c0_4 = arith.constant 0 : index
    %c0_5 = arith.constant 0 : index
    %4 = vector.load %arg6[%c0_3, %c0_4, %c0_5] : memref<1x32x128xf32, #tpu.memory_space<vmem>>, vector<1x32x128xf32>
    %5 = arith.addf %4, %3 : vector<1x32x128xf32>
    %c0_6 = arith.constant 0 : index
    %c0_7 = arith.constant 0 : index
    %c0_8 = arith.constant 0 : index
    %6 = vector.load %arg6[%c0_6, %c0_7, %c0_8] : memref<1x32x128xf32, #tpu.memory_space<vmem>>, vector<1x32x128xf32>
    tpu.vector_store %arg6[%c0_6, %c0_7, %c0_8], %5 {strides = array<i32>} : memref<1x32x128xf32, #tpu.memory_space<vmem>>, vector<1x32x128xf32>,
    %c0_9 = arith.constant 0 : index
    %c0_10 = arith.constant 0 : index
    %c0_11 = arith.constant 0 : index
    %7 = vector.load %arg7[%c0_9, %c0_10, %c0_11] : memref<1x32x128xf32, #tpu.memory_space<vmem>>, vector<1x32x128xf32>
    %8 = arith.maximumf %7, %3 : vector<1x32x128xf32>
    %c0_12 = arith.constant 0 : index
    %c0_13 = arith.constant 0 : index
    %c0_14 = arith.constant 0 : index
    %9 = vector.load %arg7[%c0_12, %c0_13, %c0_14] : memref<1x32x128xf32, #tpu.memory_space<vmem>>, vector<1x32x128xf32>
    tpu.vector_store %arg7[%c0_12, %c0_13, %c0_14], %8 {strides = array<i32>} : memref<1x32x128xf32, #tpu.memory_space<vmem>>, vector<1x32x128xf32>,
    %c0_15 = arith.constant 0 : index
    %c0_16 = arith.constant 0 : index
    %c128 = arith.constant 128 : index
    %10 = vector.load %arg2[%c0_15, %c0_16, %c128] : memref<1x32x256xf32, #tpu.memory_space<vmem>>, vector<1x32x128xf32>
    %c0_17 = arith.constant 0 : index
    %c0_18 = arith.constant 0 : index
    %c0_19 = arith.constant 0 : index
    %11 = vector.load %arg6[%c0_17, %c0_18, %c0_19] : memref<1x32x128xf32, #tpu.memory_space<vmem>>, vector<1x32x128xf32>
    %12 = arith.addf %11, %10 : vector<1x32x128xf32>
    %c0_20 = arith.constant 0 : index
    %c0_21 = arith.constant 0 : index
    %c0_22 = arith.constant 0 : index
    %13 = vector.load %arg6[%c0_20, %c0_21, %c0_22] : memref<1x32x128xf32, #tpu.memory_space<vmem>>, vector<1x32x128xf32>
    tpu.vector_store %arg6[%c0_20, %c0_21, %c0_22], %12 {strides = array<i32>} : memref<1x32x128xf32, #tpu.memory_space<vmem>>, vector<1x32x128xf32>,
    %c0_23 = arith.constant 0 : index
    %c0_24 = arith.constant 0 : index
    %c0_25 = arith.constant 0 : index
    %14 = vector.load %arg7[%c0_23, %c0_24, %c0_25] : memref<1x32x128xf32, #tpu.memory_space<vmem>>, vector<1x32x128xf32>
    %15 = arith.maximumf %14, %10 : vector<1x32x128xf32>
    %c0_26 = arith.constant 0 : index
    %c0_27 = arith.constant 0 : index
    %c0_28 = arith.constant 0 : index
    %16 = vector.load %arg7[%c0_26, %c0_27, %c0_28] : memref<1x32x128xf32, #tpu.memory_space<vmem>>, vector<1x32x128xf32>
    tpu.vector_store %arg7[%c0_26, %c0_27, %c0_28], %15 {strides = array<i32>} : memref<1x32x128xf32, #tpu.memory_space<vmem>>, vector<1x32x128xf32>,
    %c0_i32_29 = arith.constant 0 : i32
    %17 = arith.cmpi eq, %arg1, %c0_i32_29 : i32
    %18 = arith.extui %17 : i1 to i32
    %c0_i32_30 = arith.constant 0 : i32
    %19 = arith.cmpi ne, %18, %c0_i32_30 : i32
    scf.if %19 {
      %c0_31 = arith.constant 0 : index
      %c0_32 = arith.constant 0 : index
      %c0_33 = arith.constant 0 : index
      %20 = vector.load %arg6[%c0_31, %c0_32, %c0_33] : memref<1x32x128xf32, #tpu.memory_space<vmem>>, vector<1x32x128xf32>
      %cst = arith.constant dense<0.000000e+00> : vector<1x32xf32>
      %21 = vector.multi_reduction <add>, %20, %cst [2] : vector<1x32x128xf32> to vector<1x32xf32>
      %cst_34 = arith.constant 3.906250e-03 : f32
      %22 = vector.broadcast %cst_34 : f32 to vector<1x32xf32>
      %23 = arith.mulf %21, %22 : vector<1x32xf32>
      %c0_35 = arith.constant 0 : index
      %c0_36 = arith.constant 0 : index
      %c0_37 = arith.constant 0 : index
      %24 = vector.load %arg7[%c0_35, %c0_36, %c0_37] : memref<1x32x128xf32, #tpu.memory_space<vmem>>, vector<1x32x128xf32>
      %cst_38 = arith.constant dense<0xFF800000> : vector<1x32xf32>
      %25 = vector.multi_reduction <maximumf>, %24, %cst_38 [2] : vector<1x32x128xf32> to vector<1x32xf32>
      %26 = tpu.concatenate %23, %25 in 0 : vector<1x32xf32>, vector<1x32xf32> -> vector<2x32xf32>
      %c0_39 = arith.constant 0 : index
      %c0_40 = arith.constant 0 : index
      %27 = vector.load %arg3[%c0_39, %c0_40] : memref<2x32xf32, #tpu.memory_space<vmem>>, vector<2x32xf32>
      %cst_41 = arith.constant dense<0.000000e+00> : vector<2x2xf32>
      %28 = tpu.matmul %26, %27, %cst_41 {dimension_numbers = #tpu.dot_dimension_numbers<[1], [1], [0], [0], [0, 0, 1, 0], [], []>} : vector<2x32xf32>, vector<2x32xf32>, vector<2x2xf32> -> vector<2x2xf32>
      %cst_42 = arith.constant 0.000000e+00 : f32
      %29 = vector.broadcast %cst_42 : f32 to vector<2x2xf32>
      %30 = arith.maximumf %28, %29 : vector<2x2xf32>
      %c0_43 = arith.constant 0 : index
      %c0_44 = arith.constant 0 : index
      %31 = vector.load %arg4[%c0_43, %c0_44] : memref<32x2xf32, #tpu.memory_space<vmem>>, vector<32x2xf32>
      %cst_45 = arith.constant dense<0.000000e+00> : vector<2x32xf32>
      %32 = tpu.matmul %30, %31, %cst_45 {dimension_numbers = #tpu.dot_dimension_numbers<[1], [1], [0], [0], [0, 0, 1, 0], [], []>} : vector<2x2xf32>, vector<32x2xf32>, vector<2x32xf32> -> vector<2x32xf32>
      %33 = vector.extract_strided_slice %32 {offsets = [0, 0], sizes = [1, 32], strides = [1, 1]} : vector<2x32xf32> to vector<1x32xf32>
      %34 = vector.extract_strided_slice %32 {offsets = [1, 0], sizes = [1, 32], strides = [1, 1]} : vector<2x32xf32> to vector<1x32xf32>
      %35 = arith.addf %33, %34 : vector<1x32xf32>
      %36 = arith.negf %35 : vector<1x32xf32>
      %37 = math.exp %36 : vector<1x32xf32>
      %cst_46 = arith.constant 1.000000e+00 : f32
      %38 = vector.broadcast %cst_46 : f32 to vector<1x32xf32>
      %39 = arith.addf %38, %37 : vector<1x32xf32>
      %40 = arith.divf %38, %39 : vector<1x32xf32>
      %41 = vector.shape_cast %40 : vector<1x32xf32> to vector<1x1x32xf32>
      %c0_47 = arith.constant 0 : index
      %c0_48 = arith.constant 0 : index
      %c0_49 = arith.constant 0 : index
      %42 = vector.load %arg5[%c0_47, %c0_48, %c0_49] : memref<1x1x32xf32, #tpu.memory_space<vmem>>, vector<1x1x32xf32>
      tpu.vector_store %arg5[%c0_47, %c0_48, %c0_49], %41 {strides = array<i32>} : memref<1x1x32xf32, #tpu.memory_space<vmem>>, vector<1x1x32xf32>,
    } else {
    }
    return
  }
  func.func @transform_0(%arg0: i32, %arg1: i32) -> (i32, i32, i32) {
    %c0_i32 = arith.constant 0 : i32
    %c0_i32_0 = arith.constant 0 : i32
    return %arg0, %c0_i32, %arg1 : i32, i32, i32
  }
  func.func @transform_1(%arg0: i32, %arg1: i32) -> (i32, i32) {
    %c0_i32 = arith.constant 0 : i32
    %c0_i32_0 = arith.constant 0 : i32
    %c0_i32_1 = arith.constant 0 : i32
    return %c0_i32, %c0_i32_0 : i32, i32
  }
  func.func @transform_2(%arg0: i32, %arg1: i32) -> (i32, i32) {
    %c0_i32 = arith.constant 0 : i32
    %c0_i32_0 = arith.constant 0 : i32
    %c0_i32_1 = arith.constant 0 : i32
    return %c0_i32, %c0_i32_0 : i32, i32
  }
  func.func @transform_3(%arg0: i32, %arg1: i32) -> (i32, i32, i32) {
    %c0_i32 = arith.constant 0 : i32
    %c0_i32_0 = arith.constant 0 : i32
    %c0_i32_1 = arith.constant 0 : i32
    return %arg0, %c0_i32, %c0_i32_0 : i32, i32, i32
  }
}

</mosaic_0001>

<llo_original>
// kernel: tpu_custom_call.1
$region0: #{tpu_custom_call.1}
  #allocation0 [shape = 'u32[]', space=smem, size = 0x4, offset = 0x4, fixed_abs, tag = 'smem constant byte address 0x4 - core index']
  #allocation1 [shape = 'u32[72,128]{1,0:T(1,128)}', space=vmem, size = 0x9000, scoped, tag = 'internal scratch']
  #allocation2 [shape = 'f32[1,32,128]{2,1,0:T(8,128)}', space=vmem, size = 0x4000, scoped, tag = 'scratch operand']
  #allocation3 [shape = 'f32[1,32,128]{2,1,0:T(8,128)}', space=vmem, size = 0x4000, scoped, tag = 'scratch operand']
  %s0 = inlined_call_operand.hbm [shape: f32[2,32,256], index: 0, kind: input, shape index: {}]
  %s1 = inlined_call_operand.vmem [shape: f32[2,32], index: 1, kind: input, shape index: {}]
  %s2 = inlined_call_operand.vmem [shape: f32[32,2], index: 2, kind: input, shape index: {}]
  %s3 = inlined_call_operand.hbm [shape: f32[2,1,32], index: 3, kind: output, shape index: {}]
  %s4 = sld [smem:[#allocation0]]
  $region57: #{tpu_custom_call.1} parent=0
    _
  %s6 = ssub.s32 1, %s4
  %s7 = scalar_select 0, %s6, %s4
  $region1: #{tpu_custom_call.1} parent=0
    #allocation4 [shape = 'u8[65536]{0}', space=vmem, size = 0x10000, scoped, tag = 'input window, operand 0']
    #allocation5 [shape = 's32[2]{0}', space=sflag, size = 0x8, scoped, tag = 'scoped memory for tpu_custom_call.1']
    #allocation6 [shape = 's32[2]{0}', space=sflag, size = 0x8, scoped, tag = 'scoped memory for tpu_custom_call.1']
    #allocation7 [shape = 'u8[1024]{0}', space=vmem, size = 0x400, scoped, tag = 'output window, operand 0']
    %8 = vsyncpa [#allocation5], 0
    %s9 = scalar_lea.sflag [#allocation5], 1
    %10 = vsyncpa %s9, 0
    %11 = vsyncpa [#allocation6], 0
    %s12 = scalar_lea.sflag [#allocation6], 1
    %13 = vsyncpa %s12, 0
    loop: start=0, step=1, limit=4
    $region2: #{tpu_custom_call.1} parent=1 // loop_pre_header
      _
    $region3: #{tpu_custom_call.1} parent=1 // loop_header
      %s15 = sphi 0, %s19
      %p16 = scmp.ge.s32.totalorder %s15, 4
      %s22 = sphi 0, %s34
      %s23 = sphi 0, %s30
      %s24 = sphi 0, %s22
      %s25 = sphi 0, %s23
      %s26 = sphi 0, %s24
      %s27 = sphi 0, %s25
      %s39 = sphi 0, %s41
      %s42 = sphi 0, %s39
      %s43 = sphi 0, %s42
      %s59 = sphi 0, %s43
      %s63 = sphi 0, %s63
      %s65 = sphi 0, %s63
      %s66 = sphi 0, %s65
      %s80 = sphi 0, %s66
      %s84 = sphi 0, %s84
      %s86 = sphi 0, %s84
      %s87 = sphi 0, %s86
      %s101 = sphi 0, %s87
      %s107 = sphi 0, %s109
      %s110 = sphi 0, %s107
      %s111 = sphi 0, %s110
      %s127 = sphi 0, %s111
    $region4: #{tpu_custom_call.1} parent=1 // loop_header_branch
      %18 = sbr.rel (%p16) target = $region8
    $region5: #{tpu_custom_call.1} parent=1 // loop_body
      %s20 = ssub.s32 %s15, 1
      %s21 = ssub.s32 %s15, 2
      %s28 = sadd.s32 1, %s23
      %p29 = scmp.ge.s32.totalorder %s28, 1
      %s30 = scalar_select %p29, 0, %s28
      %s31 = sadd.s32 1, %s22
      %s32 = scalar_select %p29, %s31, %s22
      %p33 = scmp.ge.s32.totalorder %s32, 2
      %s34 = scalar_select %p33, 0, %s32
      %s35 = ssub.s32 %s22, %s34
      %s36 = ssub.s32 %s23, %s30
      %s37 = sor.u32 %s35, %s36
      %p38 = scmp.eq.s32.totalorder %s37, 0
      %s40 = sadd.s32 %s39, 1
      %s41 = scalar_select %p38, %s39, %s40
      %p44 = pneg %p38
      %p45 = scmp.eq.s32.totalorder %s15, 1
      %p46 = por %p44, %p45
      %p47 = scmp.ne.s32.totalorder %s39, %s42
      %p48 = scmp.eq.s32.totalorder %s15, 0
      %p49 = por %p47, %p48
      %p50 = scmp.ne.s32.totalorder %s39, %s42
      %p51 = scmp.eq.s32.totalorder %s20, 1
      %p52 = por %p50, %p51
      %p53 = scmp.ne.s32.totalorder %s42, %s43
      %p54 = scmp.eq.s32.totalorder %s20, 0
      %p55 = por %p53, %p54
      %p56 = scmp.ne.s32.totalorder %s42, %s43
      %p57 = scmp.eq.s32.totalorder %s21, 1
      %p58 = por %p56, %p57
      %p60 = scmp.ne.s32.totalorder %s43, %s59
      %p61 = scmp.eq.s32.totalorder %s21, 0
      %p62 = por %p60, %p61
      %s64 = sadd.s32 %s63, 1
      %p67 = scmp.eq.s32.totalorder %s15, 1
      %p68 = scmp.ne.s32.totalorder %s63, %s65
      %p69 = scmp.eq.s32.totalorder %s15, 0
      %p70 = por %p68, %p69
      %p71 = scmp.ne.s32.totalorder %s63, %s65
      %p72 = scmp.eq.s32.totalorder %s20, 1
      %p73 = por %p71, %p72
      %p74 = scmp.ne.s32.totalorder %s65, %s66
      %p75 = scmp.eq.s32.totalorder %s20, 0
      %p76 = por %p74, %p75
      %p77 = scmp.ne.s32.totalorder %s65, %s66
      %p78 = scmp.eq.s32.totalorder %s21, 1
      %p79 = por %p77, %p78
      %p81 = scmp.ne.s32.totalorder %s66, %s80
      %p82 = scmp.eq.s32.totalorder %s21, 0
      %p83 = por %p81, %p82
      %s85 = sadd.s32 %s84, 1
      %p88 = scmp.eq.s32.totalorder %s15, 1
      %p89 = scmp.ne.s32.totalorder %s84, %s86
      %p90 = scmp.eq.s32.totalorder %s15, 0
      %p91 = por %p89, %p90
      %p92 = scmp.ne.s32.totalorder %s84, %s86
      %p93 = scmp.eq.s32.totalorder %s20, 1
      %p94 = por %p92, %p93
      %p95 = scmp.ne.s32.totalorder %s86, %s87
      %p96 = scmp.eq.s32.totalorder %s20, 0
      %p97 = por %p95, %p96
      %p98 = scmp.ne.s32.totalorder %s86, %s87
      %p99 = scmp.eq.s32.totalorder %s21, 1
      %p100 = por %p98, %p99
      %p102 = scmp.ne.s32.totalorder %s87, %s101
      %p103 = scmp.eq.s32.totalorder %s21, 0
      %p104 = por %p102, %p103
      %s105 = ssub.s32 %s22, %s34
      %p106 = scmp.eq.s32.totalorder %s105, 0
      %s108 = sadd.s32 %s107, 1
      %s109 = scalar_select %p106, %s107, %s108
      %p112 = pneg %p106
      %p113 = scmp.eq.s32.totalorder %s15, 1
      %p114 = por %p112, %p113
      %p115 = scmp.ne.s32.totalorder %s107, %s110
      %p116 = scmp.eq.s32.totalorder %s15, 0
      %p117 = por %p115, %p116
      %p118 = scmp.ne.s32.totalorder %s107, %s110
      %p119 = scmp.eq.s32.totalorder %s20, 1
      %p120 = por %p118, %p119
      %p121 = scmp.ne.s32.totalorder %s110, %s111
      %p122 = scmp.eq.s32.totalorder %s20, 0
      %p123 = por %p121, %p122
      %p124 = scmp.ne.s32.totalorder %s110, %s111
      %p125 = scmp.eq.s32.totalorder %s21, 1
      %p126 = por %p124, %p125
      %p128 = scmp.ne.s32.totalorder %s111, %s127
      %p129 = scmp.eq.s32.totalorder %s21, 0
      %p130 = por %p128, %p129
      %p131 = scmp.le.s32.totalorder 1, %s15
      %p132 = scmp.lt.s32.totalorder %s15, 3
      %p133 = pnand %p131, %p132
      %p134 = pneg %p133
      // Predicated region
      $region9: #{tpu_custom_call.1} parent=5 // pred_check
        _
      $region10: #{tpu_custom_call.1} parent=5 // pred_check_branch
        %136 = sbr.rel (%p133) target = $region12
      $region11: #{tpu_custom_call.1} parent=5 // pred_region
        %s137 = ssub.s32 %s15, 1
        // Predicated region
        $region13: #{tpu_custom_call.1} parent=11 // pred_check
          %p138 = pneg %p76
        $region14: #{tpu_custom_call.1} parent=11 // pred_check_branch
          %140 = sbr.rel (%p138) target = $region16
        $region15: #{tpu_custom_call.1} parent=11 // pred_region
          _
        $region16: #{tpu_custom_call.1} parent=11 // pred_fallthru
          _
        // Predicated region
        $region17: #{tpu_custom_call.1} parent=11 // pred_check
          %p141 = pneg %p97
        $region18: #{tpu_custom_call.1} parent=11 // pred_check_branch
          %143 = sbr.rel (%p141) target = $region20
        $region19: #{tpu_custom_call.1} parent=11 // pred_region
          _
        $region20: #{tpu_custom_call.1} parent=11 // pred_fallthru
          _
      $region12: #{tpu_custom_call.1} parent=5 // pred_fallthru
        _
      %p144 = scmp.lt.s32.totalorder %s15, 2
      // Predicated region
      $region21: #{tpu_custom_call.1} parent=5 // pred_check
        %p145 = pneg %p144
      $region22: #{tpu_custom_call.1} parent=5 // pred_check_branch
        %147 = sbr.rel (%p145) target = $region24
      $region23: #{tpu_custom_call.1} parent=5 // pred_region
        // Predicated region
        $region25: #{tpu_custom_call.1} parent=23 // pred_check
          %p148 = pneg %p49
        $region26: #{tpu_custom_call.1} parent=23 // pred_check_branch
          %150 = sbr.rel (%p148) target = $region28
        $region27: #{tpu_custom_call.1} parent=23 // pred_region
          %s151 = sand.u32 %s39, 1
          %s152 = scalar_lea.sflag [#allocation5], %s151
          %s153 = sand.u32 %s39, 1
          %s154 = smul.addr %s153, 64
          %s155 = scalar_lea.vmem [#allocation4], %s154
          %s156 = smul.u32 2, %s23
          %158 = vsyncadd %s152, 0
          %s159 = smul.addr %s22, 8
          %s160 = sadd.s32 %s156, %s159
          %s161 = smul.addr %s160, 8
          %s162 = scalar_lea.hbm %s0, %s161
          %s163 = sshll.u32 %s162, 4
          %s164 = int_to_ptr.hbm [resolvable:$true] %s163
          %s165 = sshll.u32 %s155, 4
          %s166 = int_to_ptr.vmem [resolvable:$true] %s165
          %171 = dma.hbm_to_vmem [thread:$0]  %s164, 1024, %s166, %s152, 256, 256, 16
        $region28: #{tpu_custom_call.1} parent=23 // pred_fallthru
          _
      $region24: #{tpu_custom_call.1} parent=5 // pred_fallthru
        _
      %p172 = scmp.le.s32.totalorder 1, %s15
      %p173 = scmp.lt.s32.totalorder %s15, 3
      %p174 = pnand %p172, %p173
      %p175 = pneg %p174
      // Predicated region
      $region29: #{tpu_custom_call.1} parent=5 // pred_check
        _
      $region30: #{tpu_custom_call.1} parent=5 // pred_check_branch
        %177 = sbr.rel (%p174) target = $region32
      $region31: #{tpu_custom_call.1} parent=5 // pred_region
        %s178 = ssub.s32 %s15, 1
        %s179 = sand.u32 %s42, 1
        %s180 = scalar_lea.sflag [#allocation5], %s179
        %s181 = sand.u32 %s42, 1
        %s182 = smul.addr %s181, 64
        %s183 = scalar_lea.vmem [#allocation4], %s182
        // Predicated region
        $region33: #{tpu_custom_call.1} parent=31 // pred_check
          %p184 = pneg %p55
        $region34: #{tpu_custom_call.1} parent=31 // pred_check_branch
          %186 = sbr.rel (%p184) target = $region36
        $region35: #{tpu_custom_call.1} parent=31 // pred_region
          %188 = dma.done %s180, 1024
        $region36: #{tpu_custom_call.1} parent=31 // pred_fallthru
          _
        %s189 = sand.u32 %s42, 1
        %s190 = scalar_lea.sflag [#allocation5], %s189
        %s191 = sand.u32 %s42, 1
        %s192 = smul.addr %s191, 64
        %s193 = scalar_lea.vmem [#allocation4], %s192
        %p194 = pneg %p55
        %p195 = pneg %p52
        %p196 = pneg %p76
        %p197 = pneg %p73
        %p198 = pneg %p97
        %p199 = pneg %p94
        %p200 = pneg %p123
        %p201 = pneg %p120
        %s202 = sand.u32 %s110, 1
        %s203 = scalar_lea.sflag [#allocation6], %s202
        %s204 = sand.u32 %s110, 1
        %s205 = scalar_lea.vmem [#allocation7], %s204
        %s206 = smul.u32 2, %s25
        %p207 = scmp.eq.s32.totalorder %s25, 0
        // Predicated region
        $region37: #{tpu_custom_call.1} parent=31 // pred_check
          %p208 = pneg %p207
        $region38: #{tpu_custom_call.1} parent=31 // pred_check_branch
          %210 = sbr.rel (%p208) target = $region40
        $region39: #{tpu_custom_call.1} parent=31 // pred_region
          %211 = vst [vmem:[#allocation2] sm:$0xff] 0.0
          %212 = vst [vmem:[#allocation2 + $0x8] sm:$0xff] 0.0
          %213 = vst [vmem:[#allocation2 + $0x10] sm:$0xff] 0.0
          %214 = vst [vmem:[#allocation2 + $0x18] sm:$0xff] 0.0
          %215 = vst [vmem:[#allocation3] sm:$0xff] -inf
          %216 = vst [vmem:[#allocation3 + $0x8] sm:$0xff] -inf
          %217 = vst [vmem:[#allocation3 + $0x10] sm:$0xff] -inf
          %218 = vst [vmem:[#allocation3 + $0x18] sm:$0xff] -inf
        $region40: #{tpu_custom_call.1} parent=31 // pred_fallthru
          _
        %v219 = vld [vmem:[%s183] sm:$0xff]
        %v220 = vld [vmem:[%s183 + $0x10] sm:$0xff]
        %v221 = vld [vmem:[%s183 + $0x20] sm:$0xff]
        %v222 = vld [vmem:[%s183 + $0x30] sm:$0xff]
        %v223 = vld [vmem:[#allocation2] sm:$0xff]
        %v224 = vld [vmem:[#allocation2 + $0x8] sm:$0xff]
        %v225 = vld [vmem:[#allocation2 + $0x10] sm:$0xff]
        %v226 = vld [vmem:[#allocation2 + $0x18] sm:$0xff]
        %v227 = vadd.f32 %v223, %v219
        %v228 = vadd.f32 %v224, %v220
        %v229 = vadd.f32 %v225, %v221
        %v230 = vadd.f32 %v226, %v222
        %231 = vst [vmem:[#allocation2] sm:$0xff] %v227
        %232 = vst [vmem:[#allocation2 + $0x8] sm:$0xff] %v228
        %233 = vst [vmem:[#allocation2 + $0x10] sm:$0xff] %v229
        %234 = vst [vmem:[#allocation2 + $0x18] sm:$0xff] %v230
        %v235 = vld [vmem:[#allocation3] sm:$0xff]
        %v236 = vld [vmem:[#allocation3 + $0x8] sm:$0xff]
        %v237 = vld [vmem:[#allocation3 + $0x10] sm:$0xff]
        %v238 = vld [vmem:[#allocation3 + $0x18] sm:$0xff]
        %v239 = vmax.f32 %v235, %v219
        %v240 = vmax.f32 %v236, %v220
        %v241 = vmax.f32 %v237, %v221
        %v242 = vmax.f32 %v238, %v222
        %243 = vst [vmem:[#allocation3] sm:$0xff] %v239
        %244 = vst [vmem:[#allocation3 + $0x8] sm:$0xff] %v240
        %245 = vst [vmem:[#allocation3 + $0x10] sm:$0xff] %v241
        %246 = vst [vmem:[#allocation3 + $0x18] sm:$0xff] %v242
        %v247 = vld [vmem:[%s183 + $0x8] sm:$0xff]
        %v248 = vld [vmem:[%s183 + $0x18] sm:$0xff]
        %v249 = vld [vmem:[%s183 + $0x28] sm:$0xff]
        %v250 = vld [vmem:[%s183 + $0x38] sm:$0xff]
        %v251 = vld [vmem:[#allocation2] sm:$0xff]
        %v252 = vld [vmem:[#allocation2 + $0x8] sm:$0xff]
        %v253 = vld [vmem:[#allocation2 + $0x10] sm:$0xff]
        %v254 = vld [vmem:[#allocation2 + $0x18] sm:$0xff]
        %v255 = vadd.f32 %v251, %v247
        %v256 = vadd.f32 %v252, %v248
        %v257 = vadd.f32 %v253, %v249
        %v258 = vadd.f32 %v254, %v250
        %259 = vst [vmem:[#allocation2] sm:$0xff] %v255
        %260 = vst [vmem:[#allocation2 + $0x8] sm:$0xff] %v256
        %261 = vst [vmem:[#allocation2 + $0x10] sm:$0xff] %v257
        %262 = vst [vmem:[#allocation2 + $0x18] sm:$0xff] %v258
        %v263 = vld [vmem:[#allocation3] sm:$0xff]
        %v264 = vld [vmem:[#allocation3 + $0x8] sm:$0xff]
        %v265 = vld [vmem:[#allocation3 + $0x10] sm:$0xff]
        %v266 = vld [vmem:[#allocation3 + $0x18] sm:$0xff]
        %v267 = vmax.f32 %v263, %v247
        %v268 = vmax.f32 %v264, %v248
        %v269 = vmax.f32 %v265, %v249
        %v270 = vmax.f32 %v266, %v250
        %271 = vst [vmem:[#allocation3] sm:$0xff] %v267
        %272 = vst [vmem:[#allocation3 + $0x8] sm:$0xff] %v268
        %273 = vst [vmem:[#allocation3 + $0x10] sm:$0xff] %v269
        %274 = vst [vmem:[#allocation3 + $0x18] sm:$0xff] %v270
        // Predicated region
        $region41: #{tpu_custom_call.1} parent=31 // pred_check
          %p275 = pneg %p207
        $region42: #{tpu_custom_call.1} parent=31 // pred_check_branch
          %277 = sbr.rel (%p275) target = $region44
        $region43: #{tpu_custom_call.1} parent=31 // pred_region
          %v278 = vld [vmem:[#allocation2] sm:$0xff]
          %v279 = vld [vmem:[#allocation2 + $0x8] sm:$0xff]
          %v280 = vld [vmem:[#allocation2 + $0x10] sm:$0xff]
          %v281 = vld [vmem:[#allocation2 + $0x18] sm:$0xff]
          %282 = vadd.xlane.f32.xlu0 %v278
          %v283 = vpop.xlane.xlu0 %282
          %284 = vadd.xlane.f32.xlu0 %v279
          %v285 = vpop.xlane.xlu0 %284
          %286 = vadd.xlane.f32.xlu0 %v280
          %v287 = vpop.xlane.xlu0 %286
          %288 = vadd.xlane.f32.xlu0 %v281
          %v289 = vpop.xlane.xlu0 %288
          %v290 = vmul.f32 %v283, 0.00390625
          %v291 = vmul.f32 %v285, 0.00390625
          %v292 = vmul.f32 %v287, 0.00390625
          %v293 = vmul.f32 %v289, 0.00390625
          %v294 = vld [vmem:[#allocation3] sm:$0xff]
          %v295 = vld [vmem:[#allocation3 + $0x8] sm:$0xff]
          %v296 = vld [vmem:[#allocation3 + $0x10] sm:$0xff]
          %v297 = vld [vmem:[#allocation3 + $0x18] sm:$0xff]
          %298 = vmax.xlane.f32.xlu0 %v294
          %v299 = vpop.xlane.xlu0 %298
          %300 = vmax.xlane.f32.xlu0 %v295
          %v301 = vpop.xlane.xlu0 %300
          %302 = vmax.xlane.f32.xlu0 %v296
          %v303 = vpop.xlane.xlu0 %302
          %304 = vmax.xlane.f32.xlu0 %v297
          %v305 = vpop.xlane.xlu0 %304
          %v310 = vlaneseq
          %v311 = vand.u32 %v310, 127
          %v312 = vperm.slane %v290, %v311
          %v313 = vadd.s32 %v311, 4294967288
          %v314 = vperm.slane %v291, %v313
          %vm315 = vcmask 130112
          %v316 = vsel %vm315, %v314, %v312
          %v317 = vadd.s32 %v311, 4294967280
          %v318 = vperm.slane %v292, %v317
          %vm319 = vcmask 195712
          %v320 = vsel %vm319, %v318, %v316
          %v321 = vadd.s32 %v311, 4294967272
          %v322 = vperm.slane %v293, %v321
          %vm323 = vcmask 261312
          %v324 = vsel %vm323, %v322, %v320
          %v330 = vperm.slane %v299, %v311
          %v331 = vperm.slane %v301, %v313
          %v332 = vsel %vm315, %v331, %v330
          %v333 = vperm.slane %v303, %v317
          %v334 = vsel %vm319, %v333, %v332
          %v335 = vperm.slane %v305, %v321
          %v336 = vsel %vm323, %v335, %v334
          %vm338 = vcmask 1040384
          %v339 = vsel %vm338, %v324, %v336
          %v340 = vld [vmem:[%s1] sm:$0x3]
          %vm341 = vcmask 261120
          %v343 = vsel %vm341, %v339, 0
          %v346 = vsel %vm341, %v340, 0
          %348 = vmatpush.xpose.msra.mxu0 0.0
          %349 = vmatpush.xpose.msra.mxu0 0.0
          %350 = vmatpush.xpose.msra.mxu0 0.0
          %351 = vmatpush.xpose.msra.mxu0 0.0
          %352 = vmatpush.xpose.msra.mxu0 0.0
          %353 = vmatpush.xpose.msra.mxu0 0.0
          %354 = vmatpush.xpose.msra.mxu0 0.0
          %355 = vmatpush.xpose.msra.mxu0 0.0
          %356 = vmatpush.xpose.msra.mxu0 0.0
          %357 = vmatpush.xpose.msra.mxu0 0.0
          %358 = vmatpush.xpose.msra.mxu0 0.0
          %359 = vmatpush.xpose.msra.mxu0 0.0
          %360 = vmatpush.xpose.msra.mxu0 0.0
          %361 = vmatpush.xpose.msra.mxu0 0.0
          %362 = vmatpush.xpose.msra.mxu0 0.0
          %363 = vmatpush.xpose.msra.mxu0 %v346
          %364 = vmatmul.f32.gmra.mxu0 %v343
          %v365 = vpop.f32.mrf.mxu0
          %v366 = vadd.f32 0.0, %v365
          %367 = vdwg.mxu0
          %v368 = vmax.f32 %v366, 0.0
          %v369 = vld [vmem:[%s2] sm:$0xff]
          %v370 = vld [vmem:[%s2 + $0x8] sm:$0xff]
          %v371 = vld [vmem:[%s2 + $0x10] sm:$0xff]
          %v372 = vld [vmem:[%s2 + $0x18] sm:$0xff]
          %vm373 = vcmask 15360
          %v375 = vsel %vm373, %v368, 0
          %v378 = vsel %vm373, %v369, 0
          %v381 = vsel %vm373, %v370, 0
          %v384 = vsel %vm373, %v371, 0
          %v387 = vsel %vm373, %v372, 0
          %389 = vmatpush.xpose.msra.mxu0 0.0
          %390 = vmatpush.xpose.msra.mxu0 0.0
          %391 = vmatpush.xpose.msra.mxu0 0.0
          %392 = vmatpush.xpose.msra.mxu0 0.0
          %393 = vmatpush.xpose.msra.mxu0 0.0
          %394 = vmatpush.xpose.msra.mxu0 0.0
          %395 = vmatpush.xpose.msra.mxu0 0.0
          %396 = vmatpush.xpose.msra.mxu0 0.0
          %397 = vmatpush.xpose.msra.mxu0 0.0
          %398 = vmatpush.xpose.msra.mxu0 0.0
          %399 = vmatpush.xpose.msra.mxu0 0.0
          %400 = vmatpush.xpose.msra.mxu0 0.0
          %401 = vmatpush.xpose.msra.mxu0 %v387
          %402 = vmatpush.xpose.msra.mxu0 %v384
          %403 = vmatpush.xpose.msra.mxu0 %v381
          %404 = vmatpush.xpose.msra.mxu0 %v378
          %405 = vmatmul.f32.gmra.mxu0 %v375
          %v406 = vpop.f32.mrf.mxu0
          %v407 = vadd.f32 0.0, %v406
          %408 = vdwg.mxu0
          %v410 = vrot.slane %v407, 1
          %v412 = vadd.f32 %v407, %v410
          %v413 = vxor.u32 %v412, 2147483648
          %v414 = vmul.f32 %v413, 1.442695
          %v415 = vpow.pop %v414
          %v416 = vadd.f32 %v415, 1.0
          %v417 = vrcp.pop %v416
          %v418 = vmul.f32 %v416, %v417
          %v419 = vsub.f32 1.0, %v418
          %v420 = vmul.f32 %v417, %v419
          %v421 = vadd.f32 %v417, %v420
          %vm422 = vweird.f32 %v416
          %vm423 = vweird.f32 %v417
          %vm424 = vmor %vm422, %vm423
          %v425 = vsel %vm424, %v417, %v421
          %v426 = vand.u32 2147483647, %v416
          %vm427 = vcmp.eq.f32.partialorder %v426, 8.507059e+37
          %v428 = vand.u32 %v416, 2147483648
          %v429 = vor.u32 1.1754944e-38, %v428
          %v430 = vsel %vm427, %v429, %v425
          %v431 = vmul.f32 1.0, %v430
          %vm432 = vcmask 253952
          %433 = vst.msk [vmem:[%s205] sm:$0x1] %vm432, %v431
        $region44: #{tpu_custom_call.1} parent=31 // pred_fallthru
          _
        %s434 = sand.u32 %s110, 1
        %s435 = scalar_lea.sflag [#allocation6], %s434
        %s436 = sand.u32 %s110, 1
        %s437 = scalar_lea.vmem [#allocation7], %s436
        // Predicated region
        $region45: #{tpu_custom_call.1} parent=31 // pred_check
          %p438 = pneg %p120
        $region46: #{tpu_custom_call.1} parent=31 // pred_check_branch
          %440 = sbr.rel (%p438) target = $region48
        $region47: #{tpu_custom_call.1} parent=31 // pred_region
          %442 = vsyncadd %s435, 0
          %s443 = scalar_lea.hbm %s3, %s24
          %s445 = sshll.u32 %s437, 4
          %s446 = int_to_ptr.vmem [resolvable:$true] %s445
          %s447 = sshll.u32 %s443, 4
          %s448 = int_to_ptr.hbm [resolvable:$true] %s447
          %450 = dma.vmem_to_hbm [thread:$0]  %s446, 16, %s448, %s435
        $region48: #{tpu_custom_call.1} parent=31 // pred_fallthru
          _
      $region32: #{tpu_custom_call.1} parent=5 // pred_fallthru
        _
      %p451 = scmp.le.s32.totalorder 2, %s15
      // Predicated region
      $region49: #{tpu_custom_call.1} parent=5 // pred_check
        %p452 = pneg %p451
      $region50: #{tpu_custom_call.1} parent=5 // pred_check_branch
        %454 = sbr.rel (%p452) target = $region52
      $region51: #{tpu_custom_call.1} parent=5 // pred_region
        %s455 = ssub.s32 %s15, 2
        // Predicated region
        $region53: #{tpu_custom_call.1} parent=51 // pred_check
          %p456 = pneg %p126
        $region54: #{tpu_custom_call.1} parent=51 // pred_check_branch
          %458 = sbr.rel (%p456) target = $region56
        $region55: #{tpu_custom_call.1} parent=51 // pred_region
          %s459 = sand.u32 %s111, 1
          %s460 = scalar_lea.sflag [#allocation6], %s459
          %s461 = sand.u32 %s111, 1
          %s462 = scalar_lea.vmem [#allocation7], %s461
          %464 = dma.done %s460, 16
        $region56: #{tpu_custom_call.1} parent=51 // pred_fallthru
          _
      $region52: #{tpu_custom_call.1} parent=5 // pred_fallthru
        _
    $region6: #{tpu_custom_call.1} parent=1 // loop_footer
      %s19 = sadd.s32 1, %s15
    $region7: #{tpu_custom_call.1} parent=1 // loop_footer_branch
      %14 = sbr.rel target = $region3
    $region8: #{tpu_custom_call.1} parent=1 // loop_exit
      _
    %465 = vsyncpa [#allocation5], 1
    %s466 = scalar_lea.sflag [#allocation5], 1
    %467 = vsyncpa %s466, 1
    %468 = vsyncpa [#allocation6], 1
    %s469 = scalar_lea.sflag [#allocation6], 1
    %470 = vsyncpa %s469, 1

</llo_original>
